<compile_context>
chip_gen: v6e
topology: v6e:2x2x1
jax: 0.10.0
libtpu: 0.0.40
codegen_flags: <defaults>
</compile_context>

<pallas_src>
import functools
import math

import jax
import jax.numpy as jnp
from jax.experimental import pallas as pl
from jax.experimental.pallas import tpu as pltpu

IGNORE_LABEL = 255
THRESH = float(-math.log(0.7))          # matches -torch.log(tensor(0.7))
AUX_WEIGHTS = (1.0, 1.0)

_TARGET_LOGITS_TILE_BYTES = 2 * 1024 * 1024   # f32 logits slab per grid step
_MAX_TPL = 32768                              # hard cap on pixels per step
_LANE = 128


def _round_up(x, m):
    return ((x + m - 1) // m) * m


def _pick_tile_pixels(num_classes, hw):
    """Pixels per grid step: ~2 MiB of f32 logits, lane-aligned, capped."""
    budget = max(_LANE, _TARGET_LOGITS_TILE_BYTES // (num_classes * 4))
    tpl = max(_LANE, min((budget // _LANE) * _LANE, _MAX_TPL))
    return min(tpl, _round_up(hw, _LANE))


def _ohem_ce_kernel(logits_ref, labels_ref,
                    loss_ref, sumh_ref, cnth_ref, cntv_ref,
                    *, ignore_label, thresh):
    t = pl.program_id(1)          # pixel-tile axis (sequential / "arbitrary")

    @pl.when(t == 0)
    def _():
        sumh_ref[...] = jnp.zeros_like(sumh_ref)
        cnth_ref[...] = jnp.zeros_like(cnth_ref)
        cntv_ref[...] = jnp.zeros_like(cntv_ref)

    x = logits_ref[0].astype(jnp.float32)        # (C, TPL): classes on sublanes
    lbl = labels_ref[0]                          # (1, TPL) int32
    valid = lbl != ignore_label                  # (1, TPL) bool

    # log-softmax cross entropy: lse(x) - x[label], reduced over class axis 0.
    m = jnp.max(x, axis=0, keepdims=True)                              # (1, TPL)
    lse = m + jnp.log(jnp.sum(jnp.exp(x - m), axis=0, keepdims=True))  # (1, TPL)
    cls = jax.lax.broadcasted_iota(jnp.int32, x.shape, 0)              # (C, TPL)
    sel = jnp.sum(jnp.where(cls == lbl, x, 0.0), axis=0, keepdims=True)
    loss = jnp.where(valid, lse - sel, 0.0)      # (1, TPL); 0 on ignore / pad

    loss_ref[0] = loss                           # lane-dense store

    hard = loss > thresh                         # thresh > 0, pads never "hard"
    sumh_ref[...] += jnp.sum(jnp.where(hard, loss, 0.0))
    cnth_ref[...] += jnp.sum(hard.astype(jnp.int32))
    cntv_ref[...] += jnp.sum(valid.astype(jnp.int32))


def _per_pixel_loss_and_stats(logits_nchw, labels,
                              ignore_label=IGNORE_LABEL, thresh=THRESH):
    N, C, H, W = logits_nchw.shape
    HW = H * W

    # Free reshapes: pixels are already contiguous on the last dim (NCHW).
    x = logits_nchw.reshape(N, C, HW)            # native dtype, cast in kernel
    l = labels.reshape(N, HW).astype(jnp.int32)

    TPL = _pick_tile_pixels(C, HW)
    T = pl.cdiv(HW, TPL)
    HW_pad = T * TPL
    if HW_pad != HW:
        # Only the tiny labels array gets padded (with ignore_label); the big
        # logits array is never padded -- the kernel masks the tail via
        # `valid` so partial-tile logits reads never matter.
        l = jnp.pad(l, ((0, 0), (0, HW_pad - HW)), constant_values=ignore_label)
    l = l.reshape(N, 1, HW_pad)

    kernel = functools.partial(_ohem_ce_kernel,
                               ignore_label=ignore_label, thresh=thresh)
    loss, sum_h, cnt_h, cnt_v = pl.pallas_call(
        kernel,
        out_shape=(jax.ShapeDtypeStruct((N, 1, HW_pad), jnp.float32),
                   jax.ShapeDtypeStruct((N, 1, 1), jnp.float32),
                   jax.ShapeDtypeStruct((N, 1, 1), jnp.int32),
                   jax.ShapeDtypeStruct((N, 1, 1), jnp.int32)),
        grid=(N, T),
        in_specs=[pl.BlockSpec((1, C, TPL), lambda n, t: (n, 0, t)),
                  pl.BlockSpec((1, 1, TPL), lambda n, t: (n, 0, t))],
        out_specs=(pl.BlockSpec((1, 1, TPL), lambda n, t: (n, 0, t)),
                   pl.BlockSpec((1, 1, 1), lambda n, t: (n, 0, 0)),
                   pl.BlockSpec((1, 1, 1), lambda n, t: (n, 0, 0)),
                   pl.BlockSpec((1, 1, 1), lambda n, t: (n, 0, 0))),
        compiler_params=pltpu.CompilerParams(
            dimension_semantics=("parallel", "arbitrary")),
    )(x, l)

    return loss, HW, jnp.sum(sum_h), jnp.sum(cnt_h), jnp.sum(cnt_v)


def _ohem_single(logits_nchw, labels,
                 ignore_label=IGNORE_LABEL, thresh=THRESH):
    loss_padded, HW, sum_h, cnt_h, cnt_v = _per_pixel_loss_and_stats(
        logits_nchw, labels, ignore_label, thresh)

    n_min = cnt_v // 16                          # exact int32 counts

    # Mean of losses above the threshold (may be NaN if none, like PyTorch).
    mean_hard = sum_h / cnt_h.astype(jnp.float32)

    # Top-k fallback (k = n_min) gated behind lax.cond so the O(P log P) sort
    # and the unpad slice only run when the fallback actually triggers.
    # TODO(synk): sort/top-k has no clean Pallas TPU equivalent; kept in JAX.
    def _topk_mean(loss_pad):
        loss_flat = loss_pad[:, 0, :HW].reshape(-1)   # exactly P = N*H*W elems
        sorted_desc = -jnp.sort(-loss_flat)
        csum = jnp.cumsum(sorted_desc)
        idx = jnp.clip(n_min - 1, 0, loss_flat.shape[0] - 1)
        return csum[idx] / jnp.maximum(n_min, 1).astype(jnp.float32)

    return jax.lax.cond(cnt_h < n_min,
                        _topk_mean,
                        lambda _: mean_hard,
                        loss_padded)


def ohem_cross_entropy(preds, labels,
                       ignore_label=IGNORE_LABEL, thresh=THRESH,
                       aux_weights=AUX_WEIGHTS):
    """Equivalent of OhemCrossEntropy.forward (weight=None default)."""
    if isinstance(preds, (tuple, list)):
        return sum(w * _ohem_single(p, labels, ignore_label, thresh)
                   for p, w in zip(preds, aux_weights))
    return _ohem_single(preds, labels, ignore_label, thresh)


def _reference_ohem(logits_nchw, labels,
                    ignore_label=IGNORE_LABEL, thresh=THRESH):
    """Pure-JAX reference mirroring the PyTorch semantics."""
    N, C, H, W = logits_nchw.shape
    x = jnp.transpose(logits_nchw, (0, 2, 3, 1)).reshape(-1, C)
    x = x.astype(jnp.float32)
    l = labels.reshape(-1).astype(jnp.int32)
    valid = l != ignore_label
    lse = jax.scipy.special.logsumexp(x, axis=-1)
    sel = jnp.take_along_axis(
        x, jnp.where(valid, l, 0)[:, None], axis=-1)[:, 0]
    loss = jnp.where(valid, lse - sel, 0.0)
    n_min = jnp.sum(valid).astype(jnp.int32) // 16
    hard = loss > thresh
    cnt_h = jnp.sum(hard.astype(jnp.float32))
    sum_h = jnp.sum(jnp.where(hard, loss, 0.0))
    sorted_desc = -jnp.sort(-loss)
    csum = jnp.cumsum(sorted_desc)
    idx = jnp.clip(n_min - 1, 0, loss.shape[0] - 1)
    topk_mean = csum[idx] / jnp.maximum(n_min, 1).astype(jnp.float32)
    return jnp.where(cnt_h < n_min.astype(jnp.float32),
                     topk_mean, sum_h / cnt_h)


if __name__ == "__main__":
    key = jax.random.PRNGKey(0)
    k1, k2, k3, k4 = jax.random.split(key, 4)

    # small shapes: batch=2, classes=4, spatial=16x16
    preds = jax.random.normal(k1, (2, 4, 16, 16), dtype=jnp.float32)
    preds_aux = jax.random.normal(k4, (2, 4, 16, 16), dtype=jnp.float32)
    labels = jax.random.randint(k2, (2, 16, 16), 0, 4, dtype=jnp.int32)
    ignore_mask = jax.random.uniform(k3, (2, 16, 16)) < 0.1
    labels = jnp.where(ignore_mask, IGNORE_LABEL, labels)

    ohem_jit = jax.jit(ohem_cross_entropy)
    out = jax.block_until_ready(ohem_jit(preds, labels))
    ref = jax.block_until_ready(_reference_ohem(preds, labels))
    assert jnp.isfinite(out), f"non-finite loss: {out}"
    assert abs(float(out) - float(ref)) < 5e-4, (float(out), float(ref))

    # tuple path (aux heads): weighted sum of per-head OHEM losses.
    ohem_tuple_jit = jax.jit(ohem_cross_entropy)
    out_t = jax.block_until_ready(ohem_tuple_jit((preds, preds_aux), labels))
    ref_t = (AUX_WEIGHTS[0] * _reference_ohem(preds, labels)
             + AUX_WEIGHTS[1] * _reference_ohem(preds_aux, labels))
    ref_t = jax.block_until_ready(ref_t)
    assert jnp.isfinite(out_t), f"non-finite tuple loss: {out_t}"
    assert abs(float(out_t) - float(ref_t)) < 1e-3, (float(out_t), float(ref_t))

    print("KERNEL_OK")
</pallas_src>

<mosaic_0001>
module attributes {stable_mosaic.version = 11 : i64} {
  func.func @_ohem_ce_kernel(%arg0: i32, %arg1: i32, %arg2: memref<1x4x256xf32, #tpu.memory_space<vmem>>, %arg3: memref<1x1x256xi32, #tpu.memory_space<vmem>>, %arg4: memref<1x1x256xf32, #tpu.memory_space<vmem>>, %arg5: memref<1x1x1xf32, #tpu.memory_space<vmem>>, %arg6: memref<1x1x1xi32, #tpu.memory_space<vmem>>, %arg7: memref<1x1x1xi32, #tpu.memory_space<vmem>>) attributes {dimension_semantics = [#tpu.dimension_semantics<parallel>, #tpu.dimension_semantics<arbitrary>], iteration_bounds = array<i64: 2, 1>, scalar_prefetch = 0 : i64, scratch_operands = 0 : i64, tpu.core_type = #tpu.core_type<tc>, window_params = [{transform_indices = @transform_0, window_bounds = array<i64: 1, 4, 256>}, {transform_indices = @transform_1, window_bounds = array<i64: 1, 1, 256>}, {transform_indices = @transform_2, window_bounds = array<i64: 1, 1, 256>}, {transform_indices = @transform_3, window_bounds = array<i64: 1, 1, 1>}, {transform_indices = @transform_4, window_bounds = array<i64: 1, 1, 1>}, {transform_indices = @transform_5, window_bounds = array<i64: 1, 1, 1>}]} {
    %c0_i32 = arith.constant 0 : i32
    %0 = arith.cmpi eq, %arg1, %c0_i32 : i32
    %1 = arith.extui %0 : i1 to i32
    %c0_i32_0 = arith.constant 0 : i32
    %2 = arith.cmpi ne, %1, %c0_i32_0 : i32
    scf.if %2 {
      %cst_36 = arith.constant 0.000000e+00 : f32
      %61 = vector.broadcast %cst_36 : f32 to vector<1x1x1xf32>
      %c0_37 = arith.constant 0 : index
      %c0_38 = arith.constant 0 : index
      %c0_39 = arith.constant 0 : index
      %62 = vector.load %arg5[%c0_37, %c0_38, %c0_39] : memref<1x1x1xf32, #tpu.memory_space<vmem>>, vector<1x1x1xf32>
      tpu.vector_store %arg5[%c0_37, %c0_38, %c0_39], %61 {strides = array<i32>} : memref<1x1x1xf32, #tpu.memory_space<vmem>>, vector<1x1x1xf32>,
      %c0_i32_40 = arith.constant 0 : i32
      %63 = vector.broadcast %c0_i32_40 : i32 to vector<1x1x1xi32>
      %c0_41 = arith.constant 0 : index
      %c0_42 = arith.constant 0 : index
      %c0_43 = arith.constant 0 : index
      %64 = vector.load %arg6[%c0_41, %c0_42, %c0_43] : memref<1x1x1xi32, #tpu.memory_space<vmem>>, vector<1x1x1xi32>
      tpu.vector_store %arg6[%c0_41, %c0_42, %c0_43], %63 {strides = array<i32>} : memref<1x1x1xi32, #tpu.memory_space<vmem>>, vector<1x1x1xi32>,
      %c0_i32_44 = arith.constant 0 : i32
      %65 = vector.broadcast %c0_i32_44 : i32 to vector<1x1x1xi32>
      %c0_45 = arith.constant 0 : index
      %c0_46 = arith.constant 0 : index
      %c0_47 = arith.constant 0 : index
      %66 = vector.load %arg7[%c0_45, %c0_46, %c0_47] : memref<1x1x1xi32, #tpu.memory_space<vmem>>, vector<1x1x1xi32>
      tpu.vector_store %arg7[%c0_45, %c0_46, %c0_47], %65 {strides = array<i32>} : memref<1x1x1xi32, #tpu.memory_space<vmem>>, vector<1x1x1xi32>,
    } else {
    }
    %c0 = arith.constant 0 : index
    %c0_1 = arith.constant 0 : index
    %c0_2 = arith.constant 0 : index
    %3 = vector.load %arg2[%c0, %c0_1, %c0_2] : memref<1x4x256xf32, #tpu.memory_space<vmem>>, vector<1x4x256xf32>
    %4 = vector.shape_cast %3 : vector<1x4x256xf32> to vector<4x256xf32>
    %c0_3 = arith.constant 0 : index
    %c0_4 = arith.constant 0 : index
    %c0_5 = arith.constant 0 : index
    %5 = vector.load %arg3[%c0_3, %c0_4, %c0_5] : memref<1x1x256xi32, #tpu.memory_space<vmem>>, vector<1x1x256xi32>
    %6 = vector.shape_cast %5 : vector<1x1x256xi32> to vector<1x256xi32>
    %c255_i32 = arith.constant 255 : i32
    %7 = vector.broadcast %c255_i32 : i32 to vector<1x256xi32>
    %8 = arith.cmpi ne, %6, %7 : vector<1x256xi32>
    %cst = arith.constant dense<0xFF800000> : vector<256xf32>
    %9 = vector.multi_reduction <maximumf>, %4, %cst [0] : vector<4x256xf32> to vector<256xf32>
    %10 = vector.shape_cast %9 : vector<256xf32> to vector<1x256xf32>
    %11 = vector.broadcast %10 : vector<1x256xf32> to vector<4x256xf32>
    %12 = arith.subf %4, %11 : vector<4x256xf32>
    %13 = math.exp %12 : vector<4x256xf32>
    %cst_6 = arith.constant dense<0.000000e+00> : vector<256xf32>
    %14 = vector.multi_reduction <add>, %13, %cst_6 [0] : vector<4x256xf32> to vector<256xf32>
    %15 = vector.shape_cast %14 : vector<256xf32> to vector<1x256xf32>
    %16 = math.log %15 : vector<1x256xf32>
    %17 = arith.addf %10, %16 : vector<1x256xf32>
    %18 = tpu.iota {dimensions = array<i32: 0>} : vector<4x256xi32>
    %19 = vector.broadcast %6 : vector<1x256xi32> to vector<4x256xi32>
    %20 = arith.cmpi eq, %18, %19 : vector<4x256xi32>
    %cst_7 = arith.constant 0.000000e+00 : f32
    %21 = vector.broadcast %cst_7 : f32 to vector<4x256xf32>
    %22 = arith.select %20, %4, %21 : vector<4x256xi1>, vector<4x256xf32>
    %cst_8 = arith.constant dense<0.000000e+00> : vector<256xf32>
    %23 = vector.multi_reduction <add>, %22, %cst_8 [0] : vector<4x256xf32> to vector<256xf32>
    %24 = vector.shape_cast %23 : vector<256xf32> to vector<1x256xf32>
    %25 = arith.subf %17, %24 : vector<1x256xf32>
    %cst_9 = arith.constant 0.000000e+00 : f32
    %26 = vector.broadcast %cst_9 : f32 to vector<1x256xf32>
    %27 = arith.select %8, %25, %26 : vector<1x256xi1>, vector<1x256xf32>
    %c0_10 = arith.constant 0 : index
    %c0_11 = arith.constant 0 : index
    %c0_12 = arith.constant 0 : index
    %28 = vector.load %arg4[%c0_10, %c0_11, %c0_12] : memref<1x1x256xf32, #tpu.memory_space<vmem>>, vector<1x1x256xf32>
    %29 = vector.shape_cast %28 : vector<1x1x256xf32> to vector<1x256xf32>
    %30 = vector.shape_cast %27 : vector<1x256xf32> to vector<1x1x256xf32>
    tpu.vector_store %arg4[%c0_10, %c0_11, %c0_12], %30 {strides = array<i32>} : memref<1x1x256xf32, #tpu.memory_space<vmem>>, vector<1x1x256xf32>,
    %cst_13 = arith.constant 0.356674939 : f32
    %31 = vector.broadcast %cst_13 : f32 to vector<1x256xf32>
    %32 = arith.cmpf ogt, %27, %31 : vector<1x256xf32>
    %c0_14 = arith.constant 0 : index
    %c0_15 = arith.constant 0 : index
    %c0_16 = arith.constant 0 : index
    %33 = vector.load %arg5[%c0_14, %c0_15, %c0_16] : memref<1x1x1xf32, #tpu.memory_space<vmem>>, vector<1x1x1xf32>
    %cst_17 = arith.constant 0.000000e+00 : f32
    %34 = vector.broadcast %cst_17 : f32 to vector<1x256xf32>
    %35 = arith.select %32, %27, %34 : vector<1x256xi1>, vector<1x256xf32>
    %36 = vector.shape_cast %35 : vector<1x256xf32> to vector<1x1x256xf32>
    %cst_18 = arith.constant dense<0.000000e+00> : vector<1xf32>
    %37 = vector.multi_reduction <add>, %36, %cst_18 [1, 2] : vector<1x1x256xf32> to vector<1xf32>
    %38 = vector.shape_cast %37 : vector<1xf32> to vector<1x1x1xf32>
    %39 = vector.extract %38[0, 0, 0] : f32 from vector<1x1x1xf32>
    %40 = vector.broadcast %39 : f32 to vector<1x1x1xf32>
    %41 = arith.addf %33, %40 : vector<1x1x1xf32>
    %c0_19 = arith.constant 0 : index
    %c0_20 = arith.constant 0 : index
    %c0_21 = arith.constant 0 : index
    %42 = vector.load %arg5[%c0_19, %c0_20, %c0_21] : memref<1x1x1xf32, #tpu.memory_space<vmem>>, vector<1x1x1xf32>
    tpu.vector_store %arg5[%c0_19, %c0_20, %c0_21], %41 {strides = array<i32>} : memref<1x1x1xf32, #tpu.memory_space<vmem>>, vector<1x1x1xf32>,
    %c0_22 = arith.constant 0 : index
    %c0_23 = arith.constant 0 : index
    %c0_24 = arith.constant 0 : index
    %43 = vector.load %arg6[%c0_22, %c0_23, %c0_24] : memref<1x1x1xi32, #tpu.memory_space<vmem>>, vector<1x1x1xi32>
    %44 = arith.extui %32 : vector<1x256xi1> to vector<1x256xi32>
    %45 = vector.shape_cast %44 : vector<1x256xi32> to vector<1x1x256xi32>
    %cst_25 = arith.constant dense<0> : vector<1xi32>
    %46 = vector.multi_reduction <add>, %45, %cst_25 [1, 2] : vector<1x1x256xi32> to vector<1xi32>
    %47 = vector.shape_cast %46 : vector<1xi32> to vector<1x1x1xi32>
    %48 = vector.extract %47[0, 0, 0] : i32 from vector<1x1x1xi32>
    %49 = vector.broadcast %48 : i32 to vector<1x1x1xi32>
    %50 = arith.addi %43, %49 : vector<1x1x1xi32>
    %c0_26 = arith.constant 0 : index
    %c0_27 = arith.constant 0 : index
    %c0_28 = arith.constant 0 : index
    %51 = vector.load %arg6[%c0_26, %c0_27, %c0_28] : memref<1x1x1xi32, #tpu.memory_space<vmem>>, vector<1x1x1xi32>
    tpu.vector_store %arg6[%c0_26, %c0_27, %c0_28], %50 {strides = array<i32>} : memref<1x1x1xi32, #tpu.memory_space<vmem>>, vector<1x1x1xi32>,
    %c0_29 = arith.constant 0 : index
    %c0_30 = arith.constant 0 : index
    %c0_31 = arith.constant 0 : index
    %52 = vector.load %arg7[%c0_29, %c0_30, %c0_31] : memref<1x1x1xi32, #tpu.memory_space<vmem>>, vector<1x1x1xi32>
    %53 = arith.extui %8 : vector<1x256xi1> to vector<1x256xi32>
    %54 = vector.shape_cast %53 : vector<1x256xi32> to vector<1x1x256xi32>
    %cst_32 = arith.constant dense<0> : vector<1xi32>
    %55 = vector.multi_reduction <add>, %54, %cst_32 [1, 2] : vector<1x1x256xi32> to vector<1xi32>
    %56 = vector.shape_cast %55 : vector<1xi32> to vector<1x1x1xi32>
    %57 = vector.extract %56[0, 0, 0] : i32 from vector<1x1x1xi32>
    %58 = vector.broadcast %57 : i32 to vector<1x1x1xi32>
    %59 = arith.addi %52, %58 : vector<1x1x1xi32>
    %c0_33 = arith.constant 0 : index
    %c0_34 = arith.constant 0 : index
    %c0_35 = arith.constant 0 : index
    %60 = vector.load %arg7[%c0_33, %c0_34, %c0_35] : memref<1x1x1xi32, #tpu.memory_space<vmem>>, vector<1x1x1xi32>
    tpu.vector_store %arg7[%c0_33, %c0_34, %c0_35], %59 {strides = array<i32>} : memref<1x1x1xi32, #tpu.memory_space<vmem>>, vector<1x1x1xi32>,
    return
  }
  func.func @transform_0(%arg0: i32, %arg1: i32) -> (i32, i32, i32) {
    %c0_i32 = arith.constant 0 : i32
    %c0_i32_0 = arith.constant 0 : i32
    return %arg0, %c0_i32, %arg1 : i32, i32, i32
  }
  func.func @transform_1(%arg0: i32, %arg1: i32) -> (i32, i32, i32) {
    %c0_i32 = arith.constant 0 : i32
    %c0_i32_0 = arith.constant 0 : i32
    return %arg0, %c0_i32, %arg1 : i32, i32, i32
  }
  func.func @transform_2(%arg0: i32, %arg1: i32) -> (i32, i32, i32) {
    %c0_i32 = arith.constant 0 : i32
    %c0_i32_0 = arith.constant 0 : i32
    return %arg0, %c0_i32, %arg1 : i32, i32, i32
  }
  func.func @transform_3(%arg0: i32, %arg1: i32) -> (i32, i32, i32) {
    %c0_i32 = arith.constant 0 : i32
    %c0_i32_0 = arith.constant 0 : i32
    %c0_i32_1 = arith.constant 0 : i32
    return %arg0, %c0_i32, %c0_i32_0 : i32, i32, i32
  }
  func.func @transform_4(%arg0: i32, %arg1: i32) -> (i32, i32, i32) {
    %c0_i32 = arith.constant 0 : i32
    %c0_i32_0 = arith.constant 0 : i32
    %c0_i32_1 = arith.constant 0 : i32
    return %arg0, %c0_i32, %c0_i32_0 : i32, i32, i32
  }
  func.func @transform_5(%arg0: i32, %arg1: i32) -> (i32, i32, i32) {
    %c0_i32 = arith.constant 0 : i32
    %c0_i32_0 = arith.constant 0 : i32
    %c0_i32_1 = arith.constant 0 : i32
    return %arg0, %c0_i32, %c0_i32_0 : i32, i32, i32
  }
}

</mosaic_0001>

<llo_original>
// kernel: neg.0
$region0: #{neg.0}
  #allocation0 [shape = 's32[1]{0}', space=sflag, size = 0x4, scoped, tag = 'scoped memory for neg.0']
  %s0 = inlined_call_operand.vmem [shape: f32[2,1,256], index: 0, kind: input, shape index: {}]
  %s1 = inlined_call_operand.vmem [shape: f32[2,1,256], index: 1, kind: output, shape index: {}]
  %v2 = vld [vmem:[%s0] sm:$0x1]
  %3 = xla_tuple %v2
  %4 = xla_tuple %3
  %v5 = vxor.u32 %v2, 2147483648
  %6 = xla_tuple %v5
  %7 = vst [vmem:[%s1] sm:$0x1] %v5
  %s8 = scalar_lea.vmem %s0, 2
  %v9 = vld [vmem:[%s8] sm:$0x1]
  %10 = xla_tuple %v9
  %11 = xla_tuple %10
  %v12 = vxor.u32 %v9, 2147483648
  %13 = xla_tuple %v12
  %s14 = scalar_lea.vmem %s1, 2
  %15 = vst [vmem:[%s14] sm:$0x1] %v12
  %s16 = scalar_lea.vmem %s0, 1
  %v17 = vld [vmem:[%s16] sm:$0x1]
  %18 = xla_tuple %v17
  %19 = xla_tuple %18
  %v20 = vxor.u32 %v17, 2147483648
  %21 = xla_tuple %v20
  %s22 = scalar_lea.vmem %s1, 1
  %23 = vst [vmem:[%s22] sm:$0x1] %v20
  %s24 = scalar_lea.vmem %s0, 3
  %v25 = vld [vmem:[%s24] sm:$0x1]
  %26 = xla_tuple %v25
  %27 = xla_tuple %26
  %v28 = vxor.u32 %v25, 2147483648
  %29 = xla_tuple %v28
  %s30 = scalar_lea.vmem %s1, 3
  %31 = vst [vmem:[%s30] sm:$0x1] %v28

// kernel: ohem_cross_entropy.1
$region0: #{ohem_cross_entropy.1}
  #allocation0 [shape = 'u32[]', space=smem, size = 0x4, offset = 0x4, fixed_abs, tag = 'smem constant byte address 0x4 - core index']
  #allocation1 [shape = 'u32[144,128]{1,0:T(1,128)}', space=vmem, size = 0x12000, scoped, tag = 'internal scratch']
  %s0 = inlined_call_operand.vmem [shape: f32[2,4,256], index: 0, kind: input, shape index: {}]
  %s1 = inlined_call_operand.vmem [shape: s32[2,1,256], index: 1, kind: input, shape index: {}]
  %s2 = inlined_call_operand.vmem [shape: f32[2,1,256], index: 2, kind: output, shape index: {0}]
  %s3 = inlined_call_operand.vmem [shape: f32[2,1,1], index: 3, kind: output, shape index: {1}]
  %s4 = inlined_call_operand.vmem [shape: s32[2,1,1], index: 4, kind: output, shape index: {2}]
  %s5 = inlined_call_operand.vmem [shape: s32[2,1,1], index: 5, kind: output, shape index: {3}]
  %6 = xla_tuple %s2, %s3, %s4, %s5
  %s7 = sld [smem:[#allocation0]]
  $region69: #{ohem_cross_entropy.1} parent=0
    _
  %s9 = ssub.s32 1, %s7
  %s10 = scalar_select 0, %s9, %s7
  loop: start=0, step=1, limit=4
  $region2: #{ohem_cross_entropy.1} parent=0 // loop_pre_header
    _
  $region3: #{ohem_cross_entropy.1} parent=0 // loop_header
    %s12 = sphi 0, %s16
    %p13 = scmp.ge.s32.totalorder %s12, 4
    %s19 = sphi 0, %s31
    %s20 = sphi 0, %s27
    %s21 = sphi 0, %s19
    %s22 = sphi 0, %s20
    %s23 = sphi 0, %s21
    %s24 = sphi 0, %s22
    %s36 = sphi 0, %s38
    %s39 = sphi 0, %s36
    %s40 = sphi 0, %s39
    %s56 = sphi 0, %s40
    %s64 = sphi 0, %s66
    %s67 = sphi 0, %s64
    %s68 = sphi 0, %s67
    %s84 = sphi 0, %s68
    %s92 = sphi 0, %s94
    %s95 = sphi 0, %s92
    %s96 = sphi 0, %s95
    %s112 = sphi 0, %s96
    %s118 = sphi 0, %s120
    %s121 = sphi 0, %s118
    %s122 = sphi 0, %s121
    %s138 = sphi 0, %s122
    %s144 = sphi 0, %s146
    %s147 = sphi 0, %s144
    %s148 = sphi 0, %s147
    %s164 = sphi 0, %s148
    %s170 = sphi 0, %s172
    %s173 = sphi 0, %s170
    %s174 = sphi 0, %s173
    %s190 = sphi 0, %s174
  $region4: #{ohem_cross_entropy.1} parent=0 // loop_header_branch
    %15 = sbr.rel (%p13) target = $region8
  $region5: #{ohem_cross_entropy.1} parent=0 // loop_body
    %s17 = ssub.s32 %s12, 1
    %s18 = ssub.s32 %s12, 2
    %s25 = sadd.s32 1, %s20
    %p26 = scmp.ge.s32.totalorder %s25, 1
    %s27 = scalar_select %p26, 0, %s25
    %s28 = sadd.s32 1, %s19
    %s29 = scalar_select %p26, %s28, %s19
    %p30 = scmp.ge.s32.totalorder %s29, 2
    %s31 = scalar_select %p30, 0, %s29
    %s32 = ssub.s32 %s19, %s31
    %s33 = ssub.s32 %s20, %s27
    %s34 = sor.u32 %s32, %s33
    %p35 = scmp.eq.s32.totalorder %s34, 0
    %s37 = sadd.s32 %s36, 1
    %s38 = scalar_select %p35, %s36, %s37
    %p41 = pneg %p35
    %p42 = scmp.eq.s32.totalorder %s12, 1
    %p43 = por %p41, %p42
    %p44 = scmp.ne.s32.totalorder %s36, %s39
    %p45 = scmp.eq.s32.totalorder %s12, 0
    %p46 = por %p44, %p45
    %p47 = scmp.ne.s32.totalorder %s36, %s39
    %p48 = scmp.eq.s32.totalorder %s17, 1
    %p49 = por %p47, %p48
    %p50 = scmp.ne.s32.totalorder %s39, %s40
    %p51 = scmp.eq.s32.totalorder %s17, 0
    %p52 = por %p50, %p51
    %p53 = scmp.ne.s32.totalorder %s39, %s40
    %p54 = scmp.eq.s32.totalorder %s18, 1
    %p55 = por %p53, %p54
    %p57 = scmp.ne.s32.totalorder %s40, %s56
    %p58 = scmp.eq.s32.totalorder %s18, 0
    %p59 = por %p57, %p58
    %s60 = ssub.s32 %s19, %s31
    %s61 = ssub.s32 %s20, %s27
    %s62 = sor.u32 %s60, %s61
    %p63 = scmp.eq.s32.totalorder %s62, 0
    %s65 = sadd.s32 %s64, 1
    %s66 = scalar_select %p63, %s64, %s65
    %p69 = pneg %p63
    %p70 = scmp.eq.s32.totalorder %s12, 1
    %p71 = por %p69, %p70
    %p72 = scmp.ne.s32.totalorder %s64, %s67
    %p73 = scmp.eq.s32.totalorder %s12, 0
    %p74 = por %p72, %p73
    %p75 = scmp.ne.s32.totalorder %s64, %s67
    %p76 = scmp.eq.s32.totalorder %s17, 1
    %p77 = por %p75, %p76
    %p78 = scmp.ne.s32.totalorder %s67, %s68
    %p79 = scmp.eq.s32.totalorder %s17, 0
    %p80 = por %p78, %p79
    %p81 = scmp.ne.s32.totalorder %s67, %s68
    %p82 = scmp.eq.s32.totalorder %s18, 1
    %p83 = por %p81, %p82
    %p85 = scmp.ne.s32.totalorder %s68, %s84
    %p86 = scmp.eq.s32.totalorder %s18, 0
    %p87 = por %p85, %p86
    %s88 = ssub.s32 %s19, %s31
    %s89 = ssub.s32 %s20, %s27
    %s90 = sor.u32 %s88, %s89
    %p91 = scmp.eq.s32.totalorder %s90, 0
    %s93 = sadd.s32 %s92, 1
    %s94 = scalar_select %p91, %s92, %s93
    %p97 = pneg %p91
    %p98 = scmp.eq.s32.totalorder %s12, 1
    %p99 = por %p97, %p98
    %p100 = scmp.ne.s32.totalorder %s92, %s95
    %p101 = scmp.eq.s32.totalorder %s12, 0
    %p102 = por %p100, %p101
    %p103 = scmp.ne.s32.totalorder %s92, %s95
    %p104 = scmp.eq.s32.totalorder %s17, 1
    %p105 = por %p103, %p104
    %p106 = scmp.ne.s32.totalorder %s95, %s96
    %p107 = scmp.eq.s32.totalorder %s17, 0
    %p108 = por %p106, %p107
    %p109 = scmp.ne.s32.totalorder %s95, %s96
    %p110 = scmp.eq.s32.totalorder %s18, 1
    %p111 = por %p109, %p110
    %p113 = scmp.ne.s32.totalorder %s96, %s112
    %p114 = scmp.eq.s32.totalorder %s18, 0
    %p115 = por %p113, %p114
    %s116 = ssub.s32 %s19, %s31
    %p117 = scmp.eq.s32.totalorder %s116, 0
    %s119 = sadd.s32 %s118, 1
    %s120 = scalar_select %p117, %s118, %s119
    %p123 = pneg %p117
    %p124 = scmp.eq.s32.totalorder %s12, 1
    %p125 = por %p123, %p124
    %p126 = scmp.ne.s32.totalorder %s118, %s121
    %p127 = scmp.eq.s32.totalorder %s12, 0
    %p128 = por %p126, %p127
    %p129 = scmp.ne.s32.totalorder %s118, %s121
    %p130 = scmp.eq.s32.totalorder %s17, 1
    %p131 = por %p129, %p130
    %p132 = scmp.ne.s32.totalorder %s121, %s122
    %p133 = scmp.eq.s32.totalorder %s17, 0
    %p134 = por %p132, %p133
    %p135 = scmp.ne.s32.totalorder %s121, %s122
    %p136 = scmp.eq.s32.totalorder %s18, 1
    %p137 = por %p135, %p136
    %p139 = scmp.ne.s32.totalorder %s122, %s138
    %p140 = scmp.eq.s32.totalorder %s18, 0
    %p141 = por %p139, %p140
    %s142 = ssub.s32 %s19, %s31
    %p143 = scmp.eq.s32.totalorder %s142, 0
    %s145 = sadd.s32 %s144, 1
    %s146 = scalar_select %p143, %s144, %s145
    %p149 = pneg %p143
    %p150 = scmp.eq.s32.totalorder %s12, 1
    %p151 = por %p149, %p150
    %p152 = scmp.ne.s32.totalorder %s144, %s147
    %p153 = scmp.eq.s32.totalorder %s12, 0
    %p154 = por %p152, %p153
    %p155 = scmp.ne.s32.totalorder %s144, %s147
    %p156 = scmp.eq.s32.totalorder %s17, 1
    %p157 = por %p155, %p156
    %p158 = scmp.ne.s32.totalorder %s147, %s148
    %p159 = scmp.eq.s32.totalorder %s17, 0
    %p160 = por %p158, %p159
    %p161 = scmp.ne.s32.totalorder %s147, %s148
    %p162 = scmp.eq.s32.totalorder %s18, 1
    %p163 = por %p161, %p162
    %p165 = scmp.ne.s32.totalorder %s148, %s164
    %p166 = scmp.eq.s32.totalorder %s18, 0
    %p167 = por %p165, %p166
    %s168 = ssub.s32 %s19, %s31
    %p169 = scmp.eq.s32.totalorder %s168, 0
    %s171 = sadd.s32 %s170, 1
    %s172 = scalar_select %p169, %s170, %s171
    %p175 = pneg %p169
    %p176 = scmp.eq.s32.totalorder %s12, 1
    %p177 = por %p175, %p176
    %p178 = scmp.ne.s32.totalorder %s170, %s173
    %p179 = scmp.eq.s32.totalorder %s12, 0
    %p180 = por %p178, %p179
    %p181 = scmp.ne.s32.totalorder %s170, %s173
    %p182 = scmp.eq.s32.totalorder %s17, 1
    %p183 = por %p181, %p182
    %p184 = scmp.ne.s32.totalorder %s173, %s174
    %p185 = scmp.eq.s32.totalorder %s17, 0
    %p186 = por %p184, %p185
    %p187 = scmp.ne.s32.totalorder %s173, %s174
    %p188 = scmp.eq.s32.totalorder %s18, 1
    %p189 = por %p187, %p188
    %p191 = scmp.ne.s32.totalorder %s174, %s190
    %p192 = scmp.eq.s32.totalorder %s18, 0
    %p193 = por %p191, %p192
    %p194 = scmp.le.s32.totalorder 1, %s12
    %p195 = scmp.lt.s32.totalorder %s12, 3
    %p196 = pnand %p194, %p195
    %p197 = pneg %p196
    // Predicated region
    $region9: #{ohem_cross_entropy.1} parent=5 // pred_check
      _
    $region10: #{ohem_cross_entropy.1} parent=5 // pred_check_branch
      %199 = sbr.rel (%p196) target = $region12
    $region11: #{ohem_cross_entropy.1} parent=5 // pred_region
      %s200 = ssub.s32 %s12, 1
    $region12: #{ohem_cross_entropy.1} parent=5 // pred_fallthru
      _
    %p201 = scmp.lt.s32.totalorder %s12, 2
    // Predicated region
    $region13: #{ohem_cross_entropy.1} parent=5 // pred_check
      %p202 = pneg %p201
    $region14: #{ohem_cross_entropy.1} parent=5 // pred_check_branch
      %204 = sbr.rel (%p202) target = $region16
    $region15: #{ohem_cross_entropy.1} parent=5 // pred_region
      // Predicated region
      $region17: #{ohem_cross_entropy.1} parent=15 // pred_check
        %p205 = pneg %p46
      $region18: #{ohem_cross_entropy.1} parent=15 // pred_check_branch
        %207 = sbr.rel (%p205) target = $region20
      $region19: #{ohem_cross_entropy.1} parent=15 // pred_region
        %s208 = smul.u32 2, %s20
        %p209 = scmp.lt.s32.totalorder %s19, 1
        %s210 = scalar_select %p209, %s19, 1
        %p211 = scmp.lt.s32.totalorder %s208, 1
        %s212 = scalar_select %p211, %s208, 1
        %s213 = smul.addr %s210, 2
        %s214 = sadd.s32 %s212, %s213
        %s215 = smul.addr %s214, 4
        %s216 = scalar_lea.vmem %s0, %s215
        %s217 = smul.u32 2, %s20
      $region20: #{ohem_cross_entropy.1} parent=15 // pred_fallthru
        _
      // Predicated region
      $region21: #{ohem_cross_entropy.1} parent=15 // pred_check
        %p218 = pneg %p74
      $region22: #{ohem_cross_entropy.1} parent=15 // pred_check_branch
        %220 = sbr.rel (%p218) target = $region24
      $region23: #{ohem_cross_entropy.1} parent=15 // pred_region
        %s221 = smul.u32 2, %s20
        %p222 = scmp.lt.s32.totalorder %s19, 1
        %s223 = scalar_select %p222, %s19, 1
        %p224 = scmp.lt.s32.totalorder %s221, 1
        %s225 = scalar_select %p224, %s221, 1
        %s226 = smul.addr %s223, 2
        %s227 = sadd.s32 %s225, %s226
        %s228 = scalar_lea.vmem %s1, %s227
        %s229 = smul.u32 2, %s20
      $region24: #{ohem_cross_entropy.1} parent=15 // pred_fallthru
        _
    $region16: #{ohem_cross_entropy.1} parent=5 // pred_fallthru
      _
    %p230 = scmp.le.s32.totalorder 1, %s12
    %p231 = scmp.lt.s32.totalorder %s12, 3
    %p232 = pnand %p230, %p231
    %p233 = pneg %p232
    // Predicated region
    $region25: #{ohem_cross_entropy.1} parent=5 // pred_check
      _
    $region26: #{ohem_cross_entropy.1} parent=5 // pred_check_branch
      %235 = sbr.rel (%p232) target = $region28
    $region27: #{ohem_cross_entropy.1} parent=5 // pred_region
      %s236 = ssub.s32 %s12, 1
      %s237 = smul.u32 2, %s22
      %p238 = scmp.lt.s32.totalorder %s21, 1
      %s239 = scalar_select %p238, %s21, 1
      %p240 = scmp.lt.s32.totalorder %s237, 1
      %s241 = scalar_select %p240, %s237, 1
      %s242 = smul.addr %s239, 2
      %s243 = sadd.s32 %s241, %s242
      %s244 = smul.addr %s243, 4
      %s245 = scalar_lea.vmem %s0, %s244
      %p246 = pneg %p52
      %p247 = pneg %p49
      %s248 = smul.u32 2, %s22
      %p249 = scmp.lt.s32.totalorder %s21, 1
      %s250 = scalar_select %p249, %s21, 1
      %p251 = scmp.lt.s32.totalorder %s248, 1
      %s252 = scalar_select %p251, %s248, 1
      %s253 = smul.addr %s250, 2
      %s254 = sadd.s32 %s252, %s253
      %s255 = scalar_lea.vmem %s1, %s254
      %p256 = pneg %p80
      %p257 = pneg %p77
      %p258 = pneg %p108
      %p259 = pneg %p105
      %s260 = smul.u32 2, %s22
      %p261 = scmp.lt.s32.totalorder %s21, 1
      %s262 = scalar_select %p261, %s21, 1
      %p263 = scmp.lt.s32.totalorder %s260, 1
      %s264 = scalar_select %p263, %s260, 1
      %s265 = smul.addr %s262, 2
      %s266 = sadd.s32 %s264, %s265
      %s267 = scalar_lea.vmem %s2, %s266
      %p268 = pneg %p134
      %p269 = pneg %p131
      %p270 = scmp.lt.s32.totalorder %s21, 1
      %s271 = scalar_select %p270, %s21, 1
      %s272 = scalar_lea.vmem %s3, %s271
      %p273 = pneg %p160
      %p274 = pneg %p157
      %p275 = scmp.lt.s32.totalorder %s21, 1
      %s276 = scalar_select %p275, %s21, 1
      %s277 = scalar_lea.vmem %s4, %s276
      %p278 = pneg %p186
      %p279 = pneg %p183
      %p280 = scmp.lt.s32.totalorder %s21, 1
      %s281 = scalar_select %p280, %s21, 1
      %s282 = scalar_lea.vmem %s5, %s281
      %s283 = smul.u32 2, %s22
      %p284 = scmp.lt.s32.totalorder %s21, 1
      %s285 = scalar_select %p284, %s21, 1
      %p286 = scmp.lt.s32.totalorder %s283, 1
      %s287 = scalar_select %p286, %s283, 1
      %s288 = smul.addr %s285, 2
      %s289 = sadd.s32 %s287, %s288
      %s290 = smul.addr %s289, 4
      %s291 = scalar_lea.vmem %s0, %s290
      %s292 = smul.u32 2, %s22
      %s293 = smul.u32 2, %s22
      %p294 = scmp.lt.s32.totalorder %s21, 1
      %s295 = scalar_select %p294, %s21, 1
      %p296 = scmp.lt.s32.totalorder %s293, 1
      %s297 = scalar_select %p296, %s293, 1
      %s298 = smul.addr %s295, 2
      %s299 = sadd.s32 %s297, %s298
      %s300 = scalar_lea.vmem %s1, %s299
      %s301 = smul.u32 2, %s22
      %s302 = smul.u32 2, %s22
      %p303 = scmp.lt.s32.totalorder %s21, 1
      %s304 = scalar_select %p303, %s21, 1
      %p305 = scmp.lt.s32.totalorder %s302, 1
      %s306 = scalar_select %p305, %s302, 1
      %s307 = smul.addr %s304, 2
      %s308 = sadd.s32 %s306, %s307
      %s309 = scalar_lea.vmem %s2, %s308
      %s310 = smul.u32 2, %s22
      %p311 = scmp.lt.s32.totalorder %s21, 1
      %s312 = scalar_select %p311, %s21, 1
      %s313 = scalar_lea.vmem %s3, %s312
      %p314 = scmp.lt.s32.totalorder %s21, 1
      %s315 = scalar_select %p314, %s21, 1
      %s316 = scalar_lea.vmem %s4, %s315
      %p317 = scmp.lt.s32.totalorder %s21, 1
      %s318 = scalar_select %p317, %s21, 1
      %s319 = scalar_lea.vmem %s5, %s318
      %p320 = scmp.eq.s32.totalorder %s22, 0
      // Predicated region
      $region29: #{ohem_cross_entropy.1} parent=27 // pred_check
        %p321 = pneg %p320
      $region30: #{ohem_cross_entropy.1} parent=27 // pred_check_branch
        %323 = sbr.rel (%p321) target = $region32
      $region31: #{ohem_cross_entropy.1} parent=27 // pred_region
        %vm324 = vcmask 0
        %325 = vst.msk [vmem:[%s313] sm:$0x1] %vm324, 0.0
        %326 = vst.msk [vmem:[%s316] sm:$0x1] %vm324, 0
        %327 = vst.msk [vmem:[%s319] sm:$0x1] %vm324, 0
      $region32: #{ohem_cross_entropy.1} parent=27 // pred_fallthru
        _
      %v328 = vld [vmem:[%s291] sm:$0xff]
      %v329 = vld [vmem:[%s300] sm:$0x3]
      %vm330 = vcmp.ne.s32.totalorder %v329, 255
      %v332 = vcombine.high %v328, %v328
      %vm334 = vcmask 1043456
      %v335 = vsel %vm334, %v328, -inf
      %v336 = vrot.slane %v335, 4
      %v337 = vmax.f32 %v335, %v336
      %v338 = vrot.slane %v337, 2
      %v339 = vmax.f32 %v337, %v338
      %v340 = vrot.slane %v339, 1
      %v341 = vmax.f32 %v339, %v340
      %v342 = vsel %vm334, %v332, -inf
      %v343 = vrot.slane %v342, 4
      %v344 = vmax.f32 %v342, %v343
      %v345 = vrot.slane %v344, 2
      %v346 = vmax.f32 %v344, %v345
      %v347 = vrot.slane %v346, 1
      %v348 = vmax.f32 %v346, %v347
      %v351 = vcombine.low %v341, %v348
      %v353 = vsub.f32 %v328, %v351
      %v354 = vmul.f32 %v353, 1.442695
      %v355 = vpow.pop %v354
      %v357 = vcombine.high %v355, %v355
      %v359 = vsel %vm334, %v355, 0.0
      %v360 = vrot.slane %v359, 4
      %v361 = vadd.f32 %v359, %v360
      %v362 = vrot.slane %v361, 2
      %v363 = vadd.f32 %v361, %v362
      %v364 = vrot.slane %v363, 1
      %v365 = vadd.f32 %v363, %v364
      %v366 = vsel %vm334, %v357, 0.0
      %v367 = vrot.slane %v366, 4
      %v368 = vadd.f32 %v366, %v367
      %v369 = vrot.slane %v368, 2
      %v370 = vadd.f32 %v368, %v369
      %v371 = vrot.slane %v370, 1
      %v372 = vadd.f32 %v370, %v371
      %v373 = vlog2.pop %v365
      %v374 = vmul.f32 %v373, 0.6931472
      %v375 = vlog2.pop %v372
      %v376 = vmul.f32 %v375, 0.6931472
      %v377 = vadd.f32 %v341, %v374
      %v378 = vadd.f32 %v348, %v376
      %v379 = vlaneseq
      %v380 = vshrl.u32 %v379, 7
      %v381 = vlaneseq
      %v382 = vshrl.u32 %v381, 7
      %v383 = vsub.s32 0, %v382
      %v384 = vrot.slane %v329, %v383
      %v385 = vlaneseq
      %v386 = vshrl.u32 %v385, 7
      %v387 = vsub.s32 1, %v386
      %v388 = vrot.slane %v329, %v387
      %vm389 = vcmp.eq.s32.totalorder %v380, %v384
      %vm390 = vcmp.eq.s32.totalorder %v380, %v388
      %v391 = vsel %vm389, %v328, 0.0
      %v392 = vsel %vm390, %v332, 0.0
      %v393 = vsel %vm334, %v391, 0.0
      %v394 = vrot.slane %v393, 4
      %v395 = vadd.f32 %v393, %v394
      %v396 = vrot.slane %v395, 2
      %v397 = vadd.f32 %v395, %v396
      %v398 = vrot.slane %v397, 1
      %v399 = vadd.f32 %v397, %v398
      %v400 = vsel %vm334, %v392, 0.0
      %v401 = vrot.slane %v400, 4
      %v402 = vadd.f32 %v400, %v401
      %v403 = vrot.slane %v402, 2
      %v404 = vadd.f32 %v402, %v403
      %v405 = vrot.slane %v404, 1
      %v406 = vadd.f32 %v404, %v405
      %v407 = vsub.f32 %v377, %v399
      %v408 = vsub.f32 %v378, %v406
      %v411 = vcombine.low %v407, %v408
      %v413 = vunpack.c.l.s4 1966171168
      %v414 = vunpack.c.0.s8 %v413
      %v415 = vlaneseq
      %v416 = vshrl.u32 %v415, 7
      %v417 = vsub.s32 %v414, %v416
      %v418 = vrot.slane %v411, %v417
      %v420 = vunpack.c.l.s4 1966171168
      %v421 = vunpack.c.0.s8 %v420
      %v422 = vlaneseq
      %v423 = vshrl.u32 %v422, 7
      %v424 = vsub.s32 %v421, %v423
      %v425 = vrot.slane %v418, %v424
      %v427 = vsel %vm330, %v425, 0.0
      %v428 = vlaneseq
      %vm429 = vcmp.ge.s32.totalorder %v428, 0
      %vm430 = vcmp.lt.s32.totalorder %v428, 256
      %vm431 = vmand %vm429, %vm430
      %432 = vst.msk [vmem:[%s309] sm:$0x3] %vm431, %v427
      %vm433 = vcmp.gt.f32.partialorder %v427, 0.35667494
      %v434 = vld [vmem:[%s313] sm:$0x1]
      %v435 = vsel %vm433, %v427, 0.0
      %v437 = vlaneseq
      %v438 = vshrl.u32 %v437, 7
      %v439 = vsub.s32 0, %v438
      %v440 = vrot.slane %v435, %v439
      %v441 = vlaneseq
      %v442 = vshrl.u32 %v441, 7
      %v443 = vsub.s32 1, %v442
      %v444 = vrot.slane %v435, %v443
      %vm447 = vcmask 1040384
      %v448 = vsel %vm447, %v440, 0.0
      %v449 = vsel %vm447, %v444, 0.0
      %v450 = vadd.f32 %v448, %v449
      %451 = vadd.xlane.f32.xlu0 %v450
      %v452 = vpop.xlane.xlu0 %451
      %v453 = vrot.slane %v452, 4
      %v454 = vadd.f32 %v452, %v453
      %v455 = vrot.slane %v454, 2
      %v456 = vadd.f32 %v454, %v455
      %v457 = vrot.slane %v456, 1
      %v458 = vadd.f32 %v456, %v457
      %s459 = vtos %v458
      %v460 = vstv %s459
      %v461 = vadd.f32 %v434, %v460
      %vm462 = vcmask 0
      %463 = vst.msk [vmem:[%s313] sm:$0x1] %vm462, %v461
      %v464 = vld [vmem:[%s316] sm:$0x1]
      %v465 = vsel %vm433, 1, 0
      %v466 = vlaneseq
      %v467 = vshrl.u32 %v466, 7
      %v468 = vsub.s32 0, %v467
      %v469 = vrot.slane %v465, %v468
      %v470 = vlaneseq
      %v471 = vshrl.u32 %v470, 7
      %v472 = vsub.s32 1, %v471
      %v473 = vrot.slane %v465, %v472
      %v474 = vsel %vm447, %v469, 0
      %v475 = vsel %vm447, %v473, 0
      %v476 = vadd.s32 %v474, %v475
      %v477 = vand.u32 %v476, 65535
      %v478 = vshrl.u32 %v476, 16
      %v479 = vcvt.s32.f32 %v477
      %v480 = vcvt.s32.f32 %v478
      %481 = vadd.xlane.f32.xlu0 %v479
      %v482 = vpop.xlane.xlu0 %481
      %483 = vadd.xlane.f32.xlu0 %v480
      %v484 = vpop.xlane.xlu0 %483
      %v485 = vcvt.f32.s32 %v482
      %v486 = vcvt.f32.s32 %v484
      %v487 = vshll.u32 %v486, 16
      %v488 = vadd.s32 %v487, %v485
      %v489 = vrot.slane %v488, 4
      %v490 = vadd.s32 %v488, %v489
      %v491 = vrot.slane %v490, 2
      %v492 = vadd.s32 %v490, %v491
      %v493 = vrot.slane %v492, 1
      %v494 = vadd.s32 %v492, %v493
      %s495 = vtos %v494
      %v496 = vstv %s495
      %v497 = vadd.s32 %v464, %v496
      %498 = vst.msk [vmem:[%s316] sm:$0x1] %vm462, %v497
      %v499 = vld [vmem:[%s319] sm:$0x1]
      %v500 = vsel %vm330, 1, 0
      %v501 = vlaneseq
      %v502 = vshrl.u32 %v501, 7
      %v503 = vsub.s32 0, %v502
      %v504 = vrot.slane %v500, %v503
      %v505 = vlaneseq
      %v506 = vshrl.u32 %v505, 7
      %v507 = vsub.s32 1, %v506
      %v508 = vrot.slane %v500, %v507
      %v509 = vsel %vm447, %v504, 0
      %v510 = vsel %vm447, %v508, 0
      %v511 = vadd.s32 %v509, %v510
      %v512 = vand.u32 %v511, 65535
      %v513 = vshrl.u32 %v511, 16
      %v514 = vcvt.s32.f32 %v512
      %v515 = vcvt.s32.f32 %v513
      %516 = vadd.xlane.f32.xlu0 %v514
      %v517 = vpop.xlane.xlu0 %516
      %518 = vadd.xlane.f32.xlu0 %v515
      %v519 = vpop.xlane.xlu0 %518
      %v520 = vcvt.f32.s32 %v517
      %v521 = vcvt.f32.s32 %v519
      %v522 = vshll.u32 %v521, 16
      %v523 = vadd.s32 %v522, %v520
      %v524 = vrot.slane %v523, 4
      %v525 = vadd.s32 %v523, %v524
      %v526 = vrot.slane %v525, 2
      %v527 = vadd.s32 %v525, %v526
      %v528 = vrot.slane %v527, 1
      %v529 = vadd.s32 %v527, %v528
      %s530 = vtos %v529
      %v531 = vstv %s530
      %v532 = vadd.s32 %v499, %v531
      %533 = vst.msk [vmem:[%s319] sm:$0x1] %vm462, %v532
      %s534 = smul.u32 2, %s22
      %p535 = scmp.lt.s32.totalorder %s21, 1
      %s536 = scalar_select %p535, %s21, 1
      %p537 = scmp.lt.s32.totalorder %s534, 1
      %s538 = scalar_select %p537, %s534, 1
      %s539 = smul.addr %s536, 2
      %s540 = sadd.s32 %s538, %s539
      %s541 = scalar_lea.vmem %s2, %s540
      %p542 = scmp.lt.s32.totalorder %s21, 1
      %s543 = scalar_select %p542, %s21, 1
      %s544 = scalar_lea.vmem %s3, %s543
      %p545 = scmp.lt.s32.totalorder %s21, 1
      %s546 = scalar_select %p545, %s21, 1
      %s547 = scalar_lea.vmem %s4, %s546
      %p548 = scmp.lt.s32.totalorder %s21, 1
      %s549 = scalar_select %p548, %s21, 1
      %s550 = scalar_lea.vmem %s5, %s549
      // Predicated region
      $region33: #{ohem_cross_entropy.1} parent=27 // pred_check
        %p551 = pneg %p105
      $region34: #{ohem_cross_entropy.1} parent=27 // pred_check_branch
        %553 = sbr.rel (%p551) target = $region36
      $region35: #{ohem_cross_entropy.1} parent=27 // pred_region
        %s554 = smul.u32 2, %s22
      $region36: #{ohem_cross_entropy.1} parent=27 // pred_fallthru
        _
      // Predicated region
      $region37: #{ohem_cross_entropy.1} parent=27 // pred_check
        %p555 = pneg %p131
      $region38: #{ohem_cross_entropy.1} parent=27 // pred_check_branch
        %557 = sbr.rel (%p555) target = $region40
      $region39: #{ohem_cross_entropy.1} parent=27 // pred_region
        _
      $region40: #{ohem_cross_entropy.1} parent=27 // pred_fallthru
        _
      // Predicated region
      $region41: #{ohem_cross_entropy.1} parent=27 // pred_check
        %p558 = pneg %p157
      $region42: #{ohem_cross_entropy.1} parent=27 // pred_check_branch
        %560 = sbr.rel (%p558) target = $region44
      $region43: #{ohem_cross_entropy.1} parent=27 // pred_region
        _
      $region44: #{ohem_cross_entropy.1} parent=27 // pred_fallthru
        _
      // Predicated region
      $region45: #{ohem_cross_entropy.1} parent=27 // pred_check
        %p561 = pneg %p183
      $region46: #{ohem_cross_entropy.1} parent=27 // pred_check_branch
        %563 = sbr.rel (%p561) target = $region48
      $region47: #{ohem_cross_entropy.1} parent=27 // pred_region
        _
      $region48: #{ohem_cross_entropy.1} parent=27 // pred_fallthru
        _
    $region28: #{ohem_cross_entropy.1} parent=5 // pred_fallthru
      _
    %p564 = scmp.le.s32.totalorder 2, %s12
    // Predicated region
    $region49: #{ohem_cross_entropy.1} parent=5 // pred_check
      %p565 = pneg %p564
    $region50: #{ohem_cross_entropy.1} parent=5 // pred_check_branch
      %567 = sbr.rel (%p565) target = $region52
    $region51: #{ohem_cross_entropy.1} parent=5 // pred_region
      %s568 = ssub.s32 %s12, 2
      // Predicated region
      $region53: #{ohem_cross_entropy.1} parent=51 // pred_check
        %p569 = pneg %p111
      $region54: #{ohem_cross_entropy.1} parent=51 // pred_check_branch
        %571 = sbr.rel (%p569) target = $region56
      $region55: #{ohem_cross_entropy.1} parent=51 // pred_region
        %s572 = smul.u32 2, %s24
        %p573 = scmp.lt.s32.totalorder %s23, 1
        %s574 = scalar_select %p573, %s23, 1
        %p575 = scmp.lt.s32.totalorder %s572, 1
        %s576 = scalar_select %p575, %s572, 1
        %s577 = smul.addr %s574, 2
        %s578 = sadd.s32 %s576, %s577
        %s579 = scalar_lea.vmem %s2, %s578
      $region56: #{ohem_cross_entropy.1} parent=51 // pred_fallthru
        _
      // Predicated region
      $region57: #{ohem_cross_entropy.1} parent=51 // pred_check
        %p580 = pneg %p137
      $region58: #{ohem_cross_entropy.1} parent=51 // pred_check_branch
        %582 = sbr.rel (%p580) target = $region60
      $region59: #{ohem_cross_entropy.1} parent=51 // pred_region
        %p583 = scmp.lt.s32.totalorder %s23, 1
        %s584 = scalar_select %p583, %s23, 1
        %s585 = scalar_lea.vmem %s3, %s584
      $region60: #{ohem_cross_entropy.1} parent=51 // pred_fallthru
        _
      // Predicated region
      $region61: #{ohem_cross_entropy.1} parent=51 // pred_check
        %p586 = pneg %p163
      $region62: #{ohem_cross_entropy.1} parent=51 // pred_check_branch
        %588 = sbr.rel (%p586) target = $region64
      $region63: #{ohem_cross_entropy.1} parent=51 // pred_region
        %p589 = scmp.lt.s32.totalorder %s23, 1
        %s590 = scalar_select %p589, %s23, 1
        %s591 = scalar_lea.vmem %s4, %s590
      $region64: #{ohem_cross_entropy.1} parent=51 // pred_fallthru
        _
      // Predicated region
      $region65: #{ohem_cross_entropy.1} parent=51 // pred_check
        %p592 = pneg %p189
      $region66: #{ohem_cross_entropy.1} parent=51 // pred_check_branch
        %594 = sbr.rel (%p592) target = $region68
      $region67: #{ohem_cross_entropy.1} parent=51 // pred_region
        %p595 = scmp.lt.s32.totalorder %s23, 1
        %s596 = scalar_select %p595, %s23, 1
        %s597 = scalar_lea.vmem %s5, %s596
      $region68: #{ohem_cross_entropy.1} parent=51 // pred_fallthru
        _
    $region52: #{ohem_cross_entropy.1} parent=5 // pred_fallthru
      _
  $region6: #{ohem_cross_entropy.1} parent=0 // loop_footer
    %s16 = sadd.s32 1, %s12
  $region7: #{ohem_cross_entropy.1} parent=0 // loop_footer_branch
    %11 = sbr.rel target = $region3
  $region8: #{ohem_cross_entropy.1} parent=0 // loop_exit
    _

</llo_original>
